<compile_context>
chip_gen: v6e
topology: v6e:2x2x1
jax: 0.10.0
libtpu: 0.0.40
codegen_flags: <defaults>
</compile_context>

<pallas_src>
import jax
import jax.numpy as jnp
from jax.experimental import pallas as pl
from jax.experimental.pallas import tpu as pltpu

_LANE = 128          # lane width: multiple of 128 -> unmasked vector stores
# 4096 rows x 128 lanes x 4 B (f32) = 2 MiB per block per buffer.
# Double-buffered in + out => ~8 MiB VMEM, inside every generation's default
# scoped VMEM limit (v5e 16 MiB, v6e 32 MiB, v7x 32 MiB of 64 MiB physical).
_MAX_ROW_TILE = 4096


def _round_up(v, m):
    return ((v + m - 1) // m) * m


def _sublane_multiple(dtype) -> int:
    # vreg packing: f32 -> (8,128), bf16/f16 -> (16,128), int8/fp8 -> (32,128).
    itemsize = jnp.dtype(dtype).itemsize
    return max(8, 32 // itemsize)


def _swish_kernel(x_ref, o_ref):
    x = x_ref[...].astype(jnp.float32)
    # Numerically stable sigmoid: z = exp(-|x|) never overflows.
    #   x >= 0: sigmoid(x) = 1 / (1 + z)
    #   x <  0: sigmoid(x) = z / (1 + z)
    # exp() runs on the EUP; the single f32 divide is free while HBM-bound.
    z = jnp.exp(-jnp.abs(x))
    sig = jnp.where(x >= 0, 1.0, z) / (1.0 + z)
    o_ref[...] = (x * sig).astype(o_ref.dtype)


def swish_pallas(x):
    """Elementwise Swish. Accepts any shape / float dtype, returns same."""
    shape, dtype = x.shape, x.dtype
    n = x.size
    if n == 0:
        return x

    rows = pl.cdiv(n, _LANE)
    pad = rows * _LANE - n
    if pad:
        # Fallback path: only when the total element count is not a multiple
        # of the 128-lane width (uncommon for NN activation tensors).
        x2 = jnp.pad(x.reshape(-1), (0, pad)).reshape(rows, _LANE)
    else:
        # Contiguous reshape of a row-major array: no HBM copy.
        x2 = x.reshape(rows, _LANE)

    sub = _sublane_multiple(dtype)
    # Target >= 2 blocks (so v7x's 2 TensorCores both get work on the
    # "parallel" axis) while capping the block at ~2 MiB (f32) to amortize the
    # per-grid-step overhead; tile stays a multiple of the dtype's sublane
    # packing factor.
    row_tile = min(_MAX_ROW_TILE, max(sub, _round_up(pl.cdiv(rows, 2), sub)))
    grid = (pl.cdiv(rows, row_tile),)   # partial last block handled by Pallas

    out = pl.pallas_call(
        _swish_kernel,
        out_shape=jax.ShapeDtypeStruct((rows, _LANE), dtype),
        grid_spec=pltpu.PrefetchScalarGridSpec(
            num_scalar_prefetch=0,
            grid=grid,
            in_specs=[pl.BlockSpec((row_tile, _LANE), lambda i: (i, 0))],
            out_specs=pl.BlockSpec((row_tile, _LANE), lambda i: (i, 0)),
        ),
        compiler_params=pltpu.CompilerParams(
            dimension_semantics=("parallel",)),
    )(x2)

    if pad:
        return out.reshape(-1)[:n].reshape(shape)
    return out.reshape(shape)


class SwishPallas:
    """JAX/Pallas port of FastAutoAugment Swish (forward only)."""

    def __call__(self, x):
        return swish_pallas(x)


if __name__ == "__main__":
    key = jax.random.PRNGKey(0)
    module = SwishPallas()

    # Small NCHW activation tensor, consistent with how Swish is used in MixNet.
    N, C, H, W = 2, 4, 16, 16
    x = jax.random.normal(key, (N, C, H, W), dtype=jnp.float32)
    y = jax.block_until_ready(module(x))
    y_ref = jax.block_until_ready(x * jax.nn.sigmoid(x))
    assert y.shape == x.shape and y.dtype == x.dtype
    assert jnp.allclose(y, y_ref, atol=1e-5, rtol=1e-5)

    # Odd-sized tensor: exercises the non-128-divisible fallback and the
    # partial-last-block path.
    x_odd = jax.random.normal(jax.random.PRNGKey(1), (2, 4, 15, 15),
                              dtype=jnp.float32)
    y_odd = jax.block_until_ready(module(x_odd))
    y_odd_ref = x_odd * jax.nn.sigmoid(x_odd)
    assert y_odd.shape == x_odd.shape
    assert jnp.allclose(y_odd, y_odd_ref, atol=1e-5, rtol=1e-5)

    print("KERNEL_OK")
</pallas_src>

<mosaic_0001>
module attributes {stable_mosaic.version = 11 : i64} {
  func.func @_swish_kernel(%arg0: i32, %arg1: memref<8x128xf32, #tpu.memory_space<vmem>>, %arg2: memref<8x128xf32, #tpu.memory_space<vmem>>) attributes {dimension_semantics = [#tpu.dimension_semantics<parallel>], iteration_bounds = array<i64: 2>, scalar_prefetch = 0 : i64, scratch_operands = 0 : i64, tpu.core_type = #tpu.core_type<tc>, window_params = [{transform_indices = @transform_0, window_bounds = array<i64: 8, 128>}, {transform_indices = @transform_1, window_bounds = array<i64: 8, 128>}]} {
    %c0 = arith.constant 0 : index
    %c0_0 = arith.constant 0 : index
    %0 = vector.load %arg1[%c0, %c0_0] : memref<8x128xf32, #tpu.memory_space<vmem>>, vector<8x128xf32>
    %1 = math.absf %0 : vector<8x128xf32>
    %cst = arith.constant 0.000000e+00 : f32
    %2 = vector.broadcast %cst : f32 to vector<8x128xf32>
    %3 = arith.subf %2, %1 : vector<8x128xf32>
    %4 = math.exp %3 : vector<8x128xf32>
    %cst_1 = arith.constant 0.000000e+00 : f32
    %5 = vector.broadcast %cst_1 : f32 to vector<8x128xf32>
    %6 = arith.cmpf oge, %0, %5 : vector<8x128xf32>
    %cst_2 = arith.constant 1.000000e+00 : f32
    %7 = vector.broadcast %cst_2 : f32 to vector<8x128xf32>
    %8 = arith.select %6, %7, %4 : vector<8x128xi1>, vector<8x128xf32>
    %cst_3 = arith.constant 1.000000e+00 : f32
    %9 = vector.broadcast %cst_3 : f32 to vector<8x128xf32>
    %10 = arith.addf %9, %4 : vector<8x128xf32>
    %11 = arith.divf %8, %10 : vector<8x128xf32>
    %12 = arith.mulf %0, %11 : vector<8x128xf32>
    %c0_4 = arith.constant 0 : index
    %c0_5 = arith.constant 0 : index
    %13 = vector.load %arg2[%c0_4, %c0_5] : memref<8x128xf32, #tpu.memory_space<vmem>>, vector<8x128xf32>
    tpu.vector_store %arg2[%c0_4, %c0_5], %12 {strides = array<i32>} : memref<8x128xf32, #tpu.memory_space<vmem>>, vector<8x128xf32>,
    return
  }
  func.func @transform_0(%arg0: i32) -> (i32, i32) {
    %c0_i32 = arith.constant 0 : i32
    %c0_i32_0 = arith.constant 0 : i32
    return %arg0, %c0_i32 : i32, i32
  }
  func.func @transform_1(%arg0: i32) -> (i32, i32) {
    %c0_i32 = arith.constant 0 : i32
    %c0_i32_0 = arith.constant 0 : i32
    return %arg0, %c0_i32 : i32, i32
  }
}

</mosaic_0001>

<llo_original>
// kernel: tpu_custom_call.1
$region0: #{tpu_custom_call.1}
  #allocation0 [shape = 'u32[]', space=smem, size = 0x4, offset = 0x4, fixed_abs, tag = 'smem constant byte address 0x4 - core index']
  #allocation1 [shape = 'u32[144,128]{1,0:T(1,128)}', space=vmem, size = 0x12000, scoped, tag = 'internal scratch']
  %s0 = inlined_call_operand.hbm [shape: f32[16,128], index: 0, kind: input, shape index: {}]
  %s1 = inlined_call_operand.hbm [shape: f32[16,128], index: 1, kind: output, shape index: {}]
  %s2 = sld [smem:[#allocation0]]
  $region41: #{tpu_custom_call.1} parent=0
    _
  %s4 = ssub.s32 1, %s2
  %s5 = scalar_select 0, %s4, %s2
  $region1: #{tpu_custom_call.1} parent=0
    #allocation2 [shape = 'u8[8192]{0}', space=vmem, size = 0x2000, scoped, tag = 'input window, operand 0']
    #allocation3 [shape = 's32[2]{0}', space=sflag, size = 0x8, scoped, tag = 'scoped memory for tpu_custom_call.1']
    #allocation4 [shape = 's32[2]{0}', space=sflag, size = 0x8, scoped, tag = 'scoped memory for tpu_custom_call.1']
    #allocation5 [shape = 'u8[8192]{0}', space=vmem, size = 0x2000, scoped, tag = 'output window, operand 0']
    %6 = vsyncpa [#allocation3], 0
    %s7 = scalar_lea.sflag [#allocation3], 1
    %8 = vsyncpa %s7, 0
    %9 = vsyncpa [#allocation4], 0
    %s10 = scalar_lea.sflag [#allocation4], 1
    %11 = vsyncpa %s10, 0
    loop: start=0, step=1, limit=4
    $region2: #{tpu_custom_call.1} parent=1 // loop_pre_header
      _
    $region3: #{tpu_custom_call.1} parent=1 // loop_header
      %s13 = sphi 0, %s17
      %p14 = scmp.ge.s32.totalorder %s13, 4
      %s23 = sphi 0, %s25
      %s26 = sphi 0, %s23
      %s27 = sphi 0, %s26
      %s43 = sphi 0, %s27
      %s49 = sphi 0, %s51
      %s52 = sphi 0, %s49
      %s53 = sphi 0, %s52
      %s69 = sphi 0, %s53
    $region4: #{tpu_custom_call.1} parent=1 // loop_header_branch
      %16 = sbr.rel (%p14) target = $region8
    $region5: #{tpu_custom_call.1} parent=1 // loop_body
      %s18 = ssub.s32 %s13, 1
      %s19 = ssub.s32 %s13, 2
      %s20 = sadd.s32 %s13, 1
      %s21 = ssub.s32 %s13, %s20
      %p22 = scmp.eq.s32.totalorder %s21, 0
      %s24 = sadd.s32 %s23, 1
      %s25 = scalar_select %p22, %s23, %s24
      %p28 = pneg %p22
      %p29 = scmp.eq.s32.totalorder %s13, 1
      %p30 = por %p28, %p29
      %p31 = scmp.ne.s32.totalorder %s23, %s26
      %p32 = scmp.eq.s32.totalorder %s13, 0
      %p33 = por %p31, %p32
      %p34 = scmp.ne.s32.totalorder %s23, %s26
      %p35 = scmp.eq.s32.totalorder %s18, 1
      %p36 = por %p34, %p35
      %p37 = scmp.ne.s32.totalorder %s26, %s27
      %p38 = scmp.eq.s32.totalorder %s18, 0
      %p39 = por %p37, %p38
      %p40 = scmp.ne.s32.totalorder %s26, %s27
      %p41 = scmp.eq.s32.totalorder %s19, 1
      %p42 = por %p40, %p41
      %p44 = scmp.ne.s32.totalorder %s27, %s43
      %p45 = scmp.eq.s32.totalorder %s19, 0
      %p46 = por %p44, %p45
      %s47 = ssub.s32 %s13, %s20
      %p48 = scmp.eq.s32.totalorder %s47, 0
      %s50 = sadd.s32 %s49, 1
      %s51 = scalar_select %p48, %s49, %s50
      %p54 = pneg %p48
      %p55 = scmp.eq.s32.totalorder %s13, 1
      %p56 = por %p54, %p55
      %p57 = scmp.ne.s32.totalorder %s49, %s52
      %p58 = scmp.eq.s32.totalorder %s13, 0
      %p59 = por %p57, %p58
      %p60 = scmp.ne.s32.totalorder %s49, %s52
      %p61 = scmp.eq.s32.totalorder %s18, 1
      %p62 = por %p60, %p61
      %p63 = scmp.ne.s32.totalorder %s52, %s53
      %p64 = scmp.eq.s32.totalorder %s18, 0
      %p65 = por %p63, %p64
      %p66 = scmp.ne.s32.totalorder %s52, %s53
      %p67 = scmp.eq.s32.totalorder %s19, 1
      %p68 = por %p66, %p67
      %p70 = scmp.ne.s32.totalorder %s53, %s69
      %p71 = scmp.eq.s32.totalorder %s19, 0
      %p72 = por %p70, %p71
      %p73 = scmp.le.s32.totalorder 1, %s13
      %p74 = scmp.lt.s32.totalorder %s13, 3
      %p75 = pnand %p73, %p74
      %p76 = pneg %p75
      // Predicated region
      $region9: #{tpu_custom_call.1} parent=5 // pred_check
        _
      $region10: #{tpu_custom_call.1} parent=5 // pred_check_branch
        %78 = sbr.rel (%p75) target = $region12
      $region11: #{tpu_custom_call.1} parent=5 // pred_region
        %s79 = ssub.s32 %s13, 1
      $region12: #{tpu_custom_call.1} parent=5 // pred_fallthru
        _
      %p80 = scmp.lt.s32.totalorder %s13, 2
      // Predicated region
      $region13: #{tpu_custom_call.1} parent=5 // pred_check
        %p81 = pneg %p80
      $region14: #{tpu_custom_call.1} parent=5 // pred_check_branch
        %83 = sbr.rel (%p81) target = $region16
      $region15: #{tpu_custom_call.1} parent=5 // pred_region
        // Predicated region
        $region17: #{tpu_custom_call.1} parent=15 // pred_check
          %p84 = pneg %p33
        $region18: #{tpu_custom_call.1} parent=15 // pred_check_branch
          %86 = sbr.rel (%p84) target = $region20
        $region19: #{tpu_custom_call.1} parent=15 // pred_region
          %s87 = sand.u32 %s23, 1
          %s88 = scalar_lea.sflag [#allocation3], %s87
          %s89 = sand.u32 %s23, 1
          %s90 = smul.addr %s89, 8
          %s91 = scalar_lea.vmem [#allocation2], %s90
          %s93 = ssub.s32 128, 128
          %94 = vsyncadd %s88, %s93
          %s95 = smul.addr %s13, 128
          %s96 = scalar_lea.hbm %s0, %s95
          %s98 = sshll.u32 %s91, 4
          %s99 = int_to_ptr.vmem [resolvable:$true] %s98
          %101 = dma.hbm_to_vmem [thread:$0]  %s96, 128, %s99, %s88
        $region20: #{tpu_custom_call.1} parent=15 // pred_fallthru
          _
      $region16: #{tpu_custom_call.1} parent=5 // pred_fallthru
        _
      %p102 = scmp.le.s32.totalorder 1, %s13
      %p103 = scmp.lt.s32.totalorder %s13, 3
      %p104 = pnand %p102, %p103
      %p105 = pneg %p104
      // Predicated region
      $region21: #{tpu_custom_call.1} parent=5 // pred_check
        _
      $region22: #{tpu_custom_call.1} parent=5 // pred_check_branch
        %107 = sbr.rel (%p104) target = $region24
      $region23: #{tpu_custom_call.1} parent=5 // pred_region
        %s108 = ssub.s32 %s13, 1
        %s109 = sand.u32 %s26, 1
        %s110 = scalar_lea.sflag [#allocation3], %s109
        %s111 = sand.u32 %s26, 1
        %s112 = smul.addr %s111, 8
        %s113 = scalar_lea.vmem [#allocation2], %s112
        // Predicated region
        $region25: #{tpu_custom_call.1} parent=23 // pred_check
          %p114 = pneg %p39
        $region26: #{tpu_custom_call.1} parent=23 // pred_check_branch
          %116 = sbr.rel (%p114) target = $region28
        $region27: #{tpu_custom_call.1} parent=23 // pred_region
          %117 = dma.done %s110, 128
        $region28: #{tpu_custom_call.1} parent=23 // pred_fallthru
          _
        %s118 = sand.u32 %s26, 1
        %s119 = scalar_lea.sflag [#allocation3], %s118
        %s120 = sand.u32 %s26, 1
        %s121 = smul.addr %s120, 8
        %s122 = scalar_lea.vmem [#allocation2], %s121
        %p123 = pneg %p39
        %p124 = pneg %p36
        %p125 = pneg %p65
        %p126 = pneg %p62
        %s127 = sand.u32 %s52, 1
        %s128 = scalar_lea.sflag [#allocation4], %s127
        %s129 = sand.u32 %s52, 1
        %s130 = smul.addr %s129, 8
        %s131 = scalar_lea.vmem [#allocation5], %s130
        %v132 = vld [vmem:[%s113] sm:$0xff]
        %v133 = vand.u32 2147483647, %v132
        %v134 = vsub.f32 0.0, %v133
        %v135 = vmul.f32 %v134, 1.442695
        %v136 = vpow.pop %v135
        %vm137 = vcmp.ge.f32.partialorder %v132, 0.0
        %v138 = vsel %vm137, 1.0, %v136
        %v139 = vadd.f32 %v136, 1.0
        %v140 = vrcp.pop %v139
        %v141 = vmul.f32 %v138, %v140
        %v142 = vmul.f32 %v132, %v141
        %143 = vst [vmem:[%s131] sm:$0xff] %v142
        %s144 = sand.u32 %s52, 1
        %s145 = scalar_lea.sflag [#allocation4], %s144
        %s146 = sand.u32 %s52, 1
        %s147 = smul.addr %s146, 8
        %s148 = scalar_lea.vmem [#allocation5], %s147
        // Predicated region
        $region29: #{tpu_custom_call.1} parent=23 // pred_check
          %p149 = pneg %p62
        $region30: #{tpu_custom_call.1} parent=23 // pred_check_branch
          %151 = sbr.rel (%p149) target = $region32
        $region31: #{tpu_custom_call.1} parent=23 // pred_region
          %s153 = ssub.s32 128, 128
          %154 = vsyncadd %s145, %s153
          %s155 = smul.addr %s18, 128
          %s156 = scalar_lea.hbm %s1, %s155
          %s158 = sshll.u32 %s148, 4
          %s159 = int_to_ptr.vmem [resolvable:$true] %s158
          %161 = dma.vmem_to_hbm [thread:$0]  %s159, 128, %s156, %s145
        $region32: #{tpu_custom_call.1} parent=23 // pred_fallthru
          _
      $region24: #{tpu_custom_call.1} parent=5 // pred_fallthru
        _
      %p162 = scmp.le.s32.totalorder 2, %s13
      // Predicated region
      $region33: #{tpu_custom_call.1} parent=5 // pred_check
        %p163 = pneg %p162
      $region34: #{tpu_custom_call.1} parent=5 // pred_check_branch
        %165 = sbr.rel (%p163) target = $region36
      $region35: #{tpu_custom_call.1} parent=5 // pred_region
        %s166 = ssub.s32 %s13, 2
        // Predicated region
        $region37: #{tpu_custom_call.1} parent=35 // pred_check
          %p167 = pneg %p68
        $region38: #{tpu_custom_call.1} parent=35 // pred_check_branch
          %169 = sbr.rel (%p167) target = $region40
        $region39: #{tpu_custom_call.1} parent=35 // pred_region
          %s170 = sand.u32 %s53, 1
          %s171 = scalar_lea.sflag [#allocation4], %s170
          %s172 = sand.u32 %s53, 1
          %s173 = smul.addr %s172, 8
          %s174 = scalar_lea.vmem [#allocation5], %s173
          %175 = dma.done %s171, 128
        $region40: #{tpu_custom_call.1} parent=35 // pred_fallthru
          _
      $region36: #{tpu_custom_call.1} parent=5 // pred_fallthru
        _
    $region6: #{tpu_custom_call.1} parent=1 // loop_footer
      %s17 = sadd.s32 1, %s13
    $region7: #{tpu_custom_call.1} parent=1 // loop_footer_branch
      %12 = sbr.rel target = $region3
    $region8: #{tpu_custom_call.1} parent=1 // loop_exit
      _
    %176 = vsyncpa [#allocation3], 1
    %s177 = scalar_lea.sflag [#allocation3], 1
    %178 = vsyncpa %s177, 1
    %179 = vsyncpa [#allocation4], 1
    %s180 = scalar_lea.sflag [#allocation4], 1
    %181 = vsyncpa %s180, 1

</llo_original>
